<compile_context>
chip_gen: v6e
topology: v6e:2x2x1
jax: 0.10.0
libtpu: 0.0.40
codegen_flags: <defaults>
</compile_context>

<pallas_src>
import functools

import jax
import jax.numpy as jnp
from jax.experimental import pallas as pl
from jax.experimental.pallas import tpu as pltpu


def actor_kernel(x_ref, w1_ref, b1_ref, w2_ref, b2_ref, w3_ref, b3_ref, o_ref):
    # x tile is [TM, n_obs] (batch-major in HBM); cast to the MXU compute
    # dtype in-kernel.  All activations below are feature-major [feat, TM]
    # so batch is on the lane axis and every elementwise/EUP op is lane-dense.
    x = x_ref[...].astype(w1_ref.dtype)

    # lin1 + SiLU:  h1[f, b] = sum_o w1t[f, o] * x[b, o]   (A @ B.T form)
    h1 = jax.lax.dot_general(w1_ref[...], x, (((1,), (1,)), ((), ())),
                             preferred_element_type=jnp.float32)
    h1 = h1 + b1_ref[...]
    h1 = h1 * jax.nn.sigmoid(h1)

    # lin2 + SiLU:  h2 = w2t @ h1    ([n_h, TM])
    h2 = jax.lax.dot_general(w2_ref[...], h1.astype(w2_ref.dtype),
                             (((1,), (0,)), ((), ())),
                             preferred_element_type=jnp.float32)
    h2 = h2 + b2_ref[...]
    h2 = h2 * jax.nn.sigmoid(h2)

    # lin_mu + sigmoid:  mu = w3t @ h2   ([n_act_p, TM], dense lane store)
    mu = jax.lax.dot_general(w3_ref[...], h2.astype(w3_ref.dtype),
                             (((1,), (0,)), ((), ())),
                             preferred_element_type=jnp.float32)
    o_ref[...] = jax.nn.sigmoid(mu + b3_ref[...]).astype(o_ref.dtype)


def _round_up(x, m):
    return ((x + m - 1) // m) * m


def _nbytes(a):
    return int(a.size) * int(a.dtype.itemsize)


def prepare_actor_params(params, compute_dtype=jnp.float32):
    """One-time parameter prep (kept OUT of the per-call forward path).

    Transposes weights to [out_features, in_features], reshapes biases to
    [out_features, 1] (broadcast over batch-on-lanes), pads the action head
    to a full 8-row sublane tile, and casts MXU operands to `compute_dtype`
    (f32 = bit-faithful to the PyTorch module; bf16 = opt-in bandwidth win).
    """
    w1, b1 = params["w1"], params["b1"]
    w2, b2 = params["w2"], params["b2"]
    w3, b3 = params["w3"], params["b3"]
    n_h, n_act = w3.shape
    n_act_p = max(8, _round_up(n_act, 8))

    w3t = jnp.zeros((n_act_p, n_h), compute_dtype)
    w3t = w3t.at[:n_act, :].set(w3.T.astype(compute_dtype))
    b3c = jnp.zeros((n_act_p, 1), jnp.float32)
    b3c = b3c.at[:n_act, :].set(b3.reshape(-1, 1).astype(jnp.float32))

    return {
        "w1t": w1.T.astype(compute_dtype),
        "b1": b1.reshape(-1, 1).astype(jnp.float32),
        "w2t": w2.T.astype(compute_dtype),
        "b2": b2.reshape(-1, 1).astype(jnp.float32),
        "w3t": w3t,
        "b3": b3c,
    }


def _choose_tile(B, block_batch):
    # Small batch: a single block whose dims equal the array dims.
    if B <= 512:
        return B
    # Large batch: lane-dense tile (multiple of 128), capped at ceil(B/2) so
    # the grid has >= 2 steps (v7x shards the "parallel" axis over its 2 TCs).
    tm = min(int(block_batch), pl.cdiv(B, 2))
    return max(128, _round_up(tm, 128))


@functools.partial(jax.jit, static_argnames=("n_act", "block_batch"))
def actor_forward(x, prepped, *, n_act, block_batch=2048):
    """x: [B, n_obs] float32; prepped: output of prepare_actor_params."""
    w1t, b1 = prepped["w1t"], prepped["b1"]
    w2t, b2 = prepped["w2t"], prepped["b2"]
    w3t, b3 = prepped["w3t"], prepped["b3"]

    B, n_obs = x.shape
    n_h2 = w1t.shape[0]
    n_h = w2t.shape[0]
    n_act_p = w3t.shape[0]

    TM = _choose_tile(B, block_batch)
    grid = (pl.cdiv(B, TM),)

    def const_spec(a):
        # Same block every grid step -> DMA'd once, stays VMEM-resident.
        return pl.BlockSpec(a.shape, lambda i: (0,) * a.ndim)

    cost = pl.CostEstimate(
        flops=2 * B * (n_obs * n_h2 + n_h2 * n_h + n_h * n_act_p),
        transcendentals=B * (n_h2 + n_h + n_act_p),
        bytes_accessed=int(
            _nbytes(x)
            + sum(_nbytes(a) for a in (w1t, b1, w2t, b2, w3t, b3))
            + n_act_p * B * 4),
    )

    out_fm = pl.pallas_call(
        actor_kernel,
        out_shape=jax.ShapeDtypeStruct((n_act_p, B), jnp.float32),
        grid=grid,
        in_specs=[
            pl.BlockSpec((TM, n_obs), lambda i: (i, 0)),
            const_spec(w1t), const_spec(b1),
            const_spec(w2t), const_spec(b2),
            const_spec(w3t), const_spec(b3),
        ],
        out_specs=pl.BlockSpec((n_act_p, TM), lambda i: (0, i)),
        compiler_params=pltpu.CompilerParams(
            dimension_semantics=("parallel",)),
        cost_estimate=cost,
    )(x, w1t, b1, w2t, b2, w3t, b3)

    # Feature-major [n_act_p, B] -> caller-facing [B, n_act] (tiny slice + T).
    return out_fm[:n_act, :].T


def init_linear(key, fan_in, fan_out):
    """Deterministic init mimicking torch.nn.Linear defaults.

    Returns W of shape [fan_in, fan_out] and b of shape [1, fan_out].
    """
    k_w, k_b = jax.random.split(key)
    bound = 1.0 / jnp.sqrt(jnp.float32(fan_in))
    w = jax.random.uniform(k_w, (fan_in, fan_out), jnp.float32, -bound, bound)
    b = jax.random.uniform(k_b, (1, fan_out), jnp.float32, -bound, bound)
    return w, b


def init_actor_params(key, n_obs, n_act, n_hidden):
    k1, k2, k3 = jax.random.split(key, 3)
    w1, b1 = init_linear(k1, n_obs, n_hidden * 2)
    w2, b2 = init_linear(k2, n_hidden * 2, n_hidden)
    w3, b3 = init_linear(k3, n_hidden, n_act)
    return {"w1": w1, "b1": b1, "w2": w2, "b2": b2, "w3": w3, "b3": b3}


def actor_reference(x, params):
    """Pure-JAX f32 reference of the PyTorch forward pass."""
    ph = jax.lax.Precision.HIGHEST
    h1 = jax.nn.silu(jnp.dot(x, params["w1"], precision=ph) + params["b1"])
    h2 = jax.nn.silu(jnp.dot(h1, params["w2"], precision=ph) + params["b2"])
    return jax.nn.sigmoid(jnp.dot(h2, params["w3"], precision=ph) + params["b3"])


if __name__ == "__main__":
    n_obs, n_act, n_hidden = 16, 4, 32
    batch = 8

    key = jax.random.PRNGKey(0)
    k_params, k_x, k_big = jax.random.split(key, 3)
    params = init_actor_params(k_params, n_obs, n_act, n_hidden)
    x = jax.random.normal(k_x, (batch, n_obs), jnp.float32)

    # f32 path (semantics of the PyTorch module).
    prepped_f32 = prepare_actor_params(params, compute_dtype=jnp.float32)
    out = jax.block_until_ready(actor_forward(x, prepped_f32, n_act=n_act))
    ref = actor_reference(x, params)
    assert out.shape == (batch, n_act), out.shape
    assert jnp.allclose(out, ref, atol=1e-4, rtol=1e-4), (
        f"f32 max abs err {jnp.max(jnp.abs(out - ref))}")

    # bf16-MXU path (opt-in bandwidth optimization); looser tolerance.
    prepped_bf16 = prepare_actor_params(params, compute_dtype=jnp.bfloat16)
    out_bf16 = jax.block_until_ready(actor_forward(x, prepped_bf16, n_act=n_act))
    assert jnp.allclose(out_bf16, ref, atol=2e-2, rtol=0.0), (
        f"bf16 max abs err {jnp.max(jnp.abs(out_bf16 - ref))}")

    # Larger, non-tile-multiple batch exercising the multi-step ragged grid.
    x_big = jax.random.normal(k_big, (1000, n_obs), jnp.float32)
    out_big = jax.block_until_ready(
        actor_forward(x_big, prepped_f32, n_act=n_act, block_batch=256))
    ref_big = actor_reference(x_big, params)
    assert out_big.shape == (1000, n_act), out_big.shape
    assert jnp.allclose(out_big, ref_big, atol=1e-4, rtol=1e-4), (
        f"tiled max abs err {jnp.max(jnp.abs(out_big - ref_big))}")

    print("KERNEL_OK")
</pallas_src>

<mosaic_0001>
module attributes {stable_mosaic.version = 11 : i64} {
  func.func @actor_kernel(%arg0: i32, %arg1: memref<8x16xf32, #tpu.memory_space<vmem>>, %arg2: memref<64x16xf32, #tpu.memory_space<vmem>>, %arg3: memref<64x1xf32, #tpu.memory_space<vmem>>, %arg4: memref<32x64xf32, #tpu.memory_space<vmem>>, %arg5: memref<32x1xf32, #tpu.memory_space<vmem>>, %arg6: memref<8x32xf32, #tpu.memory_space<vmem>>, %arg7: memref<8x1xf32, #tpu.memory_space<vmem>>, %arg8: memref<8x8xf32, #tpu.memory_space<vmem>>) attributes {dimension_semantics = [#tpu.dimension_semantics<parallel>], iteration_bounds = array<i64: 1>, scalar_prefetch = 0 : i64, scratch_operands = 0 : i64, tpu.core_type = #tpu.core_type<tc>, window_params = [{transform_indices = @transform_0, window_bounds = array<i64: 8, 16>}, {pipeline_mode = #tpu.pipeline_mode<synchronous>, transform_indices = @transform_1, window_bounds = array<i64: 64, 16>}, {pipeline_mode = #tpu.pipeline_mode<synchronous>, transform_indices = @transform_2, window_bounds = array<i64: 64, 1>}, {pipeline_mode = #tpu.pipeline_mode<synchronous>, transform_indices = @transform_3, window_bounds = array<i64: 32, 64>}, {pipeline_mode = #tpu.pipeline_mode<synchronous>, transform_indices = @transform_4, window_bounds = array<i64: 32, 1>}, {pipeline_mode = #tpu.pipeline_mode<synchronous>, transform_indices = @transform_5, window_bounds = array<i64: 8, 32>}, {pipeline_mode = #tpu.pipeline_mode<synchronous>, transform_indices = @transform_6, window_bounds = array<i64: 8, 1>}, {transform_indices = @transform_7, window_bounds = array<i64: 8, 8>}]} {
    %c0 = arith.constant 0 : index
    %c0_0 = arith.constant 0 : index
    %0 = vector.load %arg1[%c0, %c0_0] : memref<8x16xf32, #tpu.memory_space<vmem>>, vector<8x16xf32>
    %c0_1 = arith.constant 0 : index
    %c0_2 = arith.constant 0 : index
    %1 = vector.load %arg2[%c0_1, %c0_2] : memref<64x16xf32, #tpu.memory_space<vmem>>, vector<64x16xf32>
    %cst = arith.constant dense<0.000000e+00> : vector<64x8xf32>
    %2 = tpu.matmul %1, %0, %cst {dimension_numbers = #tpu.dot_dimension_numbers<[1], [1], [0], [0], [0, 0, 1, 0], [], []>} : vector<64x16xf32>, vector<8x16xf32>, vector<64x8xf32> -> vector<64x8xf32>
    %c0_3 = arith.constant 0 : index
    %c0_4 = arith.constant 0 : index
    %3 = vector.load %arg3[%c0_3, %c0_4] : memref<64x1xf32, #tpu.memory_space<vmem>>, vector<64x1xf32>
    %4 = vector.broadcast %3 : vector<64x1xf32> to vector<64x8xf32>
    %5 = arith.addf %2, %4 : vector<64x8xf32>
    %6 = arith.negf %5 : vector<64x8xf32>
    %7 = math.exp %6 : vector<64x8xf32>
    %cst_5 = arith.constant 1.000000e+00 : f32
    %8 = vector.broadcast %cst_5 : f32 to vector<64x8xf32>
    %9 = arith.addf %8, %7 : vector<64x8xf32>
    %10 = arith.divf %8, %9 : vector<64x8xf32>
    %11 = arith.mulf %5, %10 : vector<64x8xf32>
    %c0_6 = arith.constant 0 : index
    %c0_7 = arith.constant 0 : index
    %12 = vector.load %arg4[%c0_6, %c0_7] : memref<32x64xf32, #tpu.memory_space<vmem>>, vector<32x64xf32>
    %cst_8 = arith.constant dense<0.000000e+00> : vector<32x8xf32>
    %13 = tpu.matmul %12, %11, %cst_8 {dimension_numbers = #tpu.dot_dimension_numbers<[1], [0], [0], [1], [0, 0, 1, 1], [], []>} : vector<32x64xf32>, vector<64x8xf32>, vector<32x8xf32> -> vector<32x8xf32>
    %c0_9 = arith.constant 0 : index
    %c0_10 = arith.constant 0 : index
    %14 = vector.load %arg5[%c0_9, %c0_10] : memref<32x1xf32, #tpu.memory_space<vmem>>, vector<32x1xf32>
    %15 = vector.broadcast %14 : vector<32x1xf32> to vector<32x8xf32>
    %16 = arith.addf %13, %15 : vector<32x8xf32>
    %17 = arith.negf %16 : vector<32x8xf32>
    %18 = math.exp %17 : vector<32x8xf32>
    %cst_11 = arith.constant 1.000000e+00 : f32
    %19 = vector.broadcast %cst_11 : f32 to vector<32x8xf32>
    %20 = arith.addf %19, %18 : vector<32x8xf32>
    %21 = arith.divf %19, %20 : vector<32x8xf32>
    %22 = arith.mulf %16, %21 : vector<32x8xf32>
    %c0_12 = arith.constant 0 : index
    %c0_13 = arith.constant 0 : index
    %23 = vector.load %arg6[%c0_12, %c0_13] : memref<8x32xf32, #tpu.memory_space<vmem>>, vector<8x32xf32>
    %cst_14 = arith.constant dense<0.000000e+00> : vector<8x8xf32>
    %24 = tpu.matmul %23, %22, %cst_14 {dimension_numbers = #tpu.dot_dimension_numbers<[1], [0], [0], [1], [0, 0, 1, 1], [], []>} : vector<8x32xf32>, vector<32x8xf32>, vector<8x8xf32> -> vector<8x8xf32>
    %c0_15 = arith.constant 0 : index
    %c0_16 = arith.constant 0 : index
    %25 = vector.load %arg7[%c0_15, %c0_16] : memref<8x1xf32, #tpu.memory_space<vmem>>, vector<8x1xf32>
    %26 = vector.broadcast %25 : vector<8x1xf32> to vector<8x8xf32>
    %27 = arith.addf %24, %26 : vector<8x8xf32>
    %28 = arith.negf %27 : vector<8x8xf32>
    %29 = math.exp %28 : vector<8x8xf32>
    %cst_17 = arith.constant 1.000000e+00 : f32
    %30 = vector.broadcast %cst_17 : f32 to vector<8x8xf32>
    %31 = arith.addf %30, %29 : vector<8x8xf32>
    %32 = arith.divf %30, %31 : vector<8x8xf32>
    %c0_18 = arith.constant 0 : index
    %c0_19 = arith.constant 0 : index
    %33 = vector.load %arg8[%c0_18, %c0_19] : memref<8x8xf32, #tpu.memory_space<vmem>>, vector<8x8xf32>
    tpu.vector_store %arg8[%c0_18, %c0_19], %32 {strides = array<i32>} : memref<8x8xf32, #tpu.memory_space<vmem>>, vector<8x8xf32>,
    return
  }
  func.func @transform_0(%arg0: i32) -> (i32, i32) {
    %c0_i32 = arith.constant 0 : i32
    %c0_i32_0 = arith.constant 0 : i32
    return %arg0, %c0_i32 : i32, i32
  }
  func.func @transform_1(%arg0: i32) -> (i32, i32) {
    %c0_i32 = arith.constant 0 : i32
    %c0_i32_0 = arith.constant 0 : i32
    %c0_i32_1 = arith.constant 0 : i32
    return %c0_i32, %c0_i32_0 : i32, i32
  }
  func.func @transform_2(%arg0: i32) -> (i32, i32) {
    %c0_i32 = arith.constant 0 : i32
    %c0_i32_0 = arith.constant 0 : i32
    %c0_i32_1 = arith.constant 0 : i32
    return %c0_i32, %c0_i32_0 : i32, i32
  }
  func.func @transform_3(%arg0: i32) -> (i32, i32) {
    %c0_i32 = arith.constant 0 : i32
    %c0_i32_0 = arith.constant 0 : i32
    %c0_i32_1 = arith.constant 0 : i32
    return %c0_i32, %c0_i32_0 : i32, i32
  }
  func.func @transform_4(%arg0: i32) -> (i32, i32) {
    %c0_i32 = arith.constant 0 : i32
    %c0_i32_0 = arith.constant 0 : i32
    %c0_i32_1 = arith.constant 0 : i32
    return %c0_i32, %c0_i32_0 : i32, i32
  }
  func.func @transform_5(%arg0: i32) -> (i32, i32) {
    %c0_i32 = arith.constant 0 : i32
    %c0_i32_0 = arith.constant 0 : i32
    %c0_i32_1 = arith.constant 0 : i32
    return %c0_i32, %c0_i32_0 : i32, i32
  }
  func.func @transform_6(%arg0: i32) -> (i32, i32) {
    %c0_i32 = arith.constant 0 : i32
    %c0_i32_0 = arith.constant 0 : i32
    %c0_i32_1 = arith.constant 0 : i32
    return %c0_i32, %c0_i32_0 : i32, i32
  }
  func.func @transform_7(%arg0: i32) -> (i32, i32) {
    %c0_i32 = arith.constant 0 : i32
    %c0_i32_0 = arith.constant 0 : i32
    return %c0_i32, %arg0 : i32, i32
  }
}

</mosaic_0001>

<llo_original>
// kernel: actor_forward.1
$region0: #{actor_forward.1}
  #allocation0 [shape = 'u32[]', space=smem, size = 0x4, offset = 0x4, fixed_abs, tag = 'smem constant byte address 0x4 - core index']
  #allocation1 [shape = 'u32[144,128]{1,0:T(1,128)}', space=vmem, size = 0x12000, scoped, tag = 'internal scratch']
  %s0 = inlined_call_operand.vmem [shape: f32[8,16], index: 0, kind: input, shape index: {}]
  %s1 = inlined_call_operand.vmem [shape: f32[64,16], index: 1, kind: input, shape index: {}]
  %s2 = inlined_call_operand.vmem [shape: f32[64,1], index: 2, kind: input, shape index: {}]
  %s3 = inlined_call_operand.vmem [shape: f32[32,64], index: 3, kind: input, shape index: {}]
  %s4 = inlined_call_operand.vmem [shape: f32[32,1], index: 4, kind: input, shape index: {}]
  %s5 = inlined_call_operand.vmem [shape: f32[8,32], index: 5, kind: input, shape index: {}]
  %s6 = inlined_call_operand.vmem [shape: f32[8,1], index: 6, kind: input, shape index: {}]
  %s7 = inlined_call_operand.vmem [shape: f32[8,8], index: 7, kind: output, shape index: {}]
  %s8 = sld [smem:[#allocation0]]
  $region38: #{actor_forward.1} parent=0
    _
  %s10 = ssub.s32 1, %s8
  %s11 = scalar_select 0, %s10, %s8
  // Predicated region
  $region2: #{actor_forward.1} parent=0 // pred_check
    _
  $region3: #{actor_forward.1} parent=0 // pred_check_branch
    %13 = sbr.rel (0) target = $region5
  $region4: #{actor_forward.1} parent=0 // pred_region
    _
  $region5: #{actor_forward.1} parent=0 // pred_fallthru
    _
  // Predicated region
  $region6: #{actor_forward.1} parent=0 // pred_check
    _
  $region7: #{actor_forward.1} parent=0 // pred_check_branch
    %15 = sbr.rel (0) target = $region9
  $region8: #{actor_forward.1} parent=0 // pred_region
    _
  $region9: #{actor_forward.1} parent=0 // pred_fallthru
    _
  // Predicated region
  $region10: #{actor_forward.1} parent=0 // pred_check
    _
  $region11: #{actor_forward.1} parent=0 // pred_check_branch
    %17 = sbr.rel (0) target = $region13
  $region12: #{actor_forward.1} parent=0 // pred_region
    _
  $region13: #{actor_forward.1} parent=0 // pred_fallthru
    _
  // Predicated region
  $region14: #{actor_forward.1} parent=0 // pred_check
    _
  $region15: #{actor_forward.1} parent=0 // pred_check_branch
    %19 = sbr.rel (0) target = $region17
  $region16: #{actor_forward.1} parent=0 // pred_region
    _
  $region17: #{actor_forward.1} parent=0 // pred_fallthru
    _
  // Predicated region
  $region18: #{actor_forward.1} parent=0 // pred_check
    _
  $region19: #{actor_forward.1} parent=0 // pred_check_branch
    %21 = sbr.rel (0) target = $region21
  $region20: #{actor_forward.1} parent=0 // pred_region
    _
  $region21: #{actor_forward.1} parent=0 // pred_fallthru
    _
  // Predicated region
  $region22: #{actor_forward.1} parent=0 // pred_check
    _
  $region23: #{actor_forward.1} parent=0 // pred_check_branch
    %23 = sbr.rel (0) target = $region25
  $region24: #{actor_forward.1} parent=0 // pred_region
    _
  $region25: #{actor_forward.1} parent=0 // pred_fallthru
    _
  // Predicated region
  $region26: #{actor_forward.1} parent=0 // pred_check
    _
  $region27: #{actor_forward.1} parent=0 // pred_check_branch
    %25 = sbr.rel (0) target = $region29
  $region28: #{actor_forward.1} parent=0 // pred_region
    _
  $region29: #{actor_forward.1} parent=0 // pred_fallthru
    _
  %v26 = vld [vmem:[%s0] sm:$0xff]
  %v27 = vld [vmem:[%s1] sm:$0xff]
  %v28 = vld [vmem:[%s1 + $0x8] sm:$0xff]
  %v29 = vld [vmem:[%s1 + $0x10] sm:$0xff]
  %v30 = vld [vmem:[%s1 + $0x18] sm:$0xff]
  %v31 = vld [vmem:[%s1 + $0x20] sm:$0xff]
  %v32 = vld [vmem:[%s1 + $0x28] sm:$0xff]
  %v33 = vld [vmem:[%s1 + $0x30] sm:$0xff]
  %v34 = vld [vmem:[%s1 + $0x38] sm:$0xff]
  %v35 = vld [vmem:[%s2] sm:$0xff]
  %v36 = vld [vmem:[%s2 + $0x8] sm:$0xff]
  %v37 = vld [vmem:[%s2 + $0x10] sm:$0xff]
  %v38 = vld [vmem:[%s2 + $0x18] sm:$0xff]
  %v39 = vld [vmem:[%s2 + $0x20] sm:$0xff]
  %v40 = vld [vmem:[%s2 + $0x28] sm:$0xff]
  %v41 = vld [vmem:[%s2 + $0x30] sm:$0xff]
  %v42 = vld [vmem:[%s2 + $0x38] sm:$0xff]
  %44 = vset.pattern.permute.xlu0 0
  %45 = vperm.xlu0 %44, %v35
  %v46 = vpop.permute.xlu0 %45
  %49 = vset.pattern.permute.xlu0 0
  %50 = vperm.xlu0 %49, %v36
  %v51 = vpop.permute.xlu0 %50
  %54 = vset.pattern.permute.xlu0 0
  %55 = vperm.xlu0 %54, %v37
  %v56 = vpop.permute.xlu0 %55
  %59 = vset.pattern.permute.xlu0 0
  %60 = vperm.xlu0 %59, %v38
  %v61 = vpop.permute.xlu0 %60
  %64 = vset.pattern.permute.xlu0 0
  %65 = vperm.xlu0 %64, %v39
  %v66 = vpop.permute.xlu0 %65
  %69 = vset.pattern.permute.xlu0 0
  %70 = vperm.xlu0 %69, %v40
  %v71 = vpop.permute.xlu0 %70
  %74 = vset.pattern.permute.xlu0 0
  %75 = vperm.xlu0 %74, %v41
  %v76 = vpop.permute.xlu0 %75
  %79 = vset.pattern.permute.xlu0 0
  %80 = vperm.xlu0 %79, %v42
  %v81 = vpop.permute.xlu0 %80
  %vm83 = vcmask 130048
  %v85 = vsel %vm83, %v27, 0
  %v88 = vsel %vm83, %v28, 0
  %v91 = vsel %vm83, %v29, 0
  %v94 = vsel %vm83, %v30, 0
  %v97 = vsel %vm83, %v31, 0
  %v100 = vsel %vm83, %v32, 0
  %v103 = vsel %vm83, %v33, 0
  %v106 = vsel %vm83, %v34, 0
  %v109 = vsel %vm83, %v26, 0
  %111 = vmatprep.subr.mxu0 0.0
  %112 = vmatpush1.xpose.msra.mxu0 0.0
  %113 = vmatprep.subr.mxu0 0.0
  %114 = vmatpush1.xpose.msra.mxu0 0.0
  %115 = vmatprep.subr.mxu0 0.0
  %116 = vmatpush1.xpose.msra.mxu0 0.0
  %117 = vmatprep.subr.mxu0 0.0
  %118 = vmatpush1.xpose.msra.mxu0 0.0
  %119 = vmatprep.subr.mxu0 0.0
  %120 = vmatpush1.xpose.msra.mxu0 0.0
  %121 = vmatprep.subr.mxu0 0.0
  %122 = vmatpush1.xpose.msra.mxu0 0.0
  %123 = vmatprep.subr.mxu0 0.0
  %124 = vmatpush1.xpose.msra.mxu0 0.0
  %125 = vmatprep.subr.mxu0 0.0
  %126 = vmatpush1.xpose.msra.mxu0 0.0
  %127 = vmatprep.subr.mxu0 0.0
  %128 = vmatpush1.xpose.msra.mxu0 0.0
  %129 = vmatprep.subr.mxu0 0.0
  %130 = vmatpush1.xpose.msra.mxu0 0.0
  %131 = vmatprep.subr.mxu0 0.0
  %132 = vmatpush1.xpose.msra.mxu0 0.0
  %133 = vmatprep.subr.mxu0 0.0
  %134 = vmatpush1.xpose.msra.mxu0 0.0
  %135 = vmatprep.subr.mxu0 0.0
  %136 = vmatpush1.xpose.msra.mxu0 0.0
  %137 = vmatprep.subr.mxu0 0.0
  %138 = vmatpush1.xpose.msra.mxu0 0.0
  %139 = vmatprep.subr.mxu0 0.0
  %140 = vmatpush1.xpose.msra.mxu0 0.0
  %141 = vmatprep.subr.mxu0 0.0
  %142 = vmatpush1.xpose.msra.mxu0 %v109
  %143 = vmatprep.subr.mxu0 0.0
  %144 = vmatpush2.xpose.msra.mxu0 0.0
  %145 = vmatprep.subr.mxu0 0.0
  %146 = vmatpush2.xpose.msra.mxu0 0.0
  %147 = vmatprep.subr.mxu0 0.0
  %148 = vmatpush2.xpose.msra.mxu0 0.0
  %149 = vmatprep.subr.mxu0 0.0
  %150 = vmatpush2.xpose.msra.mxu0 0.0
  %151 = vmatprep.subr.mxu0 0.0
  %152 = vmatpush2.xpose.msra.mxu0 0.0
  %153 = vmatprep.subr.mxu0 0.0
  %154 = vmatpush2.xpose.msra.mxu0 0.0
  %155 = vmatprep.subr.mxu0 0.0
  %156 = vmatpush2.xpose.msra.mxu0 0.0
  %157 = vmatprep.subr.mxu0 0.0
  %158 = vmatpush2.xpose.msra.mxu0 0.0
  %159 = vmatprep.subr.mxu0 0.0
  %160 = vmatpush2.xpose.msra.mxu0 0.0
  %161 = vmatprep.subr.mxu0 0.0
  %162 = vmatpush2.xpose.msra.mxu0 0.0
  %163 = vmatprep.subr.mxu0 0.0
  %164 = vmatpush2.xpose.msra.mxu0 0.0
  %165 = vmatprep.subr.mxu0 0.0
  %166 = vmatpush2.xpose.msra.mxu0 0.0
  %167 = vmatprep.subr.mxu0 0.0
  %168 = vmatpush2.xpose.msra.mxu0 0.0
  %169 = vmatprep.subr.mxu0 0.0
  %170 = vmatpush2.xpose.msra.mxu0 0.0
  %171 = vmatprep.subr.mxu0 0.0
  %172 = vmatpush2.xpose.msra.mxu0 0.0
  %173 = vmatprep.subr.mxu0 0.0
  %174 = vmatpush2.xpose.msra.mxu0 0.0
  %175 = vmatprep.mubr.f32.mxu0 0.0
  %176 = vmatmul.mubr.f32.gmra.mxu0 %v85
  %v177 = vpop.f32.mrf.mxu0
  %v178 = vadd.f32 %v46, %v177
  %v179 = vpop.f32.mrf.mxu0
  %180 = vmatprep.mubr.f32.mxu0 0.0
  %181 = vmatmul.mubr.f32.gmra.mxu0 %v88
  %v182 = vpop.f32.mrf.mxu0
  %v183 = vadd.f32 %v51, %v182
  %v184 = vpop.f32.mrf.mxu0
  %185 = vmatprep.mubr.f32.mxu0 0.0
  %186 = vmatmul.mubr.f32.gmra.mxu0 %v91
  %v187 = vpop.f32.mrf.mxu0
  %v188 = vadd.f32 %v56, %v187
  %v189 = vpop.f32.mrf.mxu0
  %190 = vmatprep.mubr.f32.mxu0 0.0
  %191 = vmatmul.mubr.f32.gmra.mxu0 %v94
  %v192 = vpop.f32.mrf.mxu0
  %v193 = vadd.f32 %v61, %v192
  %v194 = vpop.f32.mrf.mxu0
  %195 = vmatprep.mubr.f32.mxu0 0.0
  %196 = vmatmul.mubr.f32.gmra.mxu0 %v97
  %v197 = vpop.f32.mrf.mxu0
  %v198 = vadd.f32 %v66, %v197
  %v199 = vpop.f32.mrf.mxu0
  %200 = vmatprep.mubr.f32.mxu0 0.0
  %201 = vmatmul.mubr.f32.gmra.mxu0 %v100
  %v202 = vpop.f32.mrf.mxu0
  %v203 = vadd.f32 %v71, %v202
  %v204 = vpop.f32.mrf.mxu0
  %205 = vmatprep.mubr.f32.mxu0 0.0
  %206 = vmatmul.mubr.f32.gmra.mxu0 %v103
  %v207 = vpop.f32.mrf.mxu0
  %v208 = vadd.f32 %v76, %v207
  %v209 = vpop.f32.mrf.mxu0
  %210 = vmatprep.mubr.f32.mxu0 0.0
  %211 = vmatmul.mubr.f32.gmra.mxu0 %v106
  %v212 = vpop.f32.mrf.mxu0
  %v213 = vadd.f32 %v81, %v212
  %v214 = vpop.f32.mrf.mxu0
  %215 = vdwg.mxu0
  %v216 = vxor.u32 %v178, 2147483648
  %v217 = vxor.u32 %v183, 2147483648
  %v218 = vxor.u32 %v188, 2147483648
  %v219 = vxor.u32 %v193, 2147483648
  %v220 = vxor.u32 %v198, 2147483648
  %v221 = vxor.u32 %v203, 2147483648
  %v222 = vxor.u32 %v208, 2147483648
  %v223 = vxor.u32 %v213, 2147483648
  %v224 = vmul.f32 %v216, 1.442695
  %v225 = vpow.pop %v224
  %v226 = vmul.f32 %v217, 1.442695
  %v227 = vpow.pop %v226
  %v228 = vmul.f32 %v218, 1.442695
  %v229 = vpow.pop %v228
  %v230 = vmul.f32 %v219, 1.442695
  %v231 = vpow.pop %v230
  %v232 = vmul.f32 %v220, 1.442695
  %v233 = vpow.pop %v232
  %v234 = vmul.f32 %v221, 1.442695
  %v235 = vpow.pop %v234
  %v236 = vmul.f32 %v222, 1.442695
  %v237 = vpow.pop %v236
  %v238 = vmul.f32 %v223, 1.442695
  %v239 = vpow.pop %v238
  %v240 = vadd.f32 %v225, 1.0
  %v241 = vadd.f32 %v227, 1.0
  %v242 = vadd.f32 %v229, 1.0
  %v243 = vadd.f32 %v231, 1.0
  %v244 = vadd.f32 %v233, 1.0
  %v245 = vadd.f32 %v235, 1.0
  %v246 = vadd.f32 %v237, 1.0
  %v247 = vadd.f32 %v239, 1.0
  %v248 = vrcp.pop %v240
  %v249 = vmul.f32 1.0, %v248
  %v250 = vrcp.pop %v241
  %v251 = vmul.f32 1.0, %v250
  %v252 = vrcp.pop %v242
  %v253 = vmul.f32 1.0, %v252
  %v254 = vrcp.pop %v243
  %v255 = vmul.f32 1.0, %v254
  %v256 = vrcp.pop %v244
  %v257 = vmul.f32 1.0, %v256
  %v258 = vrcp.pop %v245
  %v259 = vmul.f32 1.0, %v258
  %v260 = vrcp.pop %v246
  %v261 = vmul.f32 1.0, %v260
  %v262 = vrcp.pop %v247
  %v263 = vmul.f32 1.0, %v262
  %v264 = vmul.f32 %v178, %v249
  %v265 = vmul.f32 %v183, %v251
  %v266 = vmul.f32 %v188, %v253
  %v267 = vmul.f32 %v193, %v255
  %v268 = vmul.f32 %v198, %v257
  %v269 = vmul.f32 %v203, %v259
  %v270 = vmul.f32 %v208, %v261
  %v271 = vmul.f32 %v213, %v263
  %v272 = vld [vmem:[%s3] sm:$0xff]
  %v273 = vld [vmem:[%s3 + $0x8] sm:$0xff]
  %v274 = vld [vmem:[%s3 + $0x10] sm:$0xff]
  %v275 = vld [vmem:[%s3 + $0x18] sm:$0xff]
  %v276 = vld [vmem:[%s4] sm:$0xff]
  %v277 = vld [vmem:[%s4 + $0x8] sm:$0xff]
  %v278 = vld [vmem:[%s4 + $0x10] sm:$0xff]
  %v279 = vld [vmem:[%s4 + $0x18] sm:$0xff]
  %281 = vset.pattern.permute.xlu0 0
  %282 = vperm.xlu0 %281, %v276
  %v283 = vpop.permute.xlu0 %282
  %286 = vset.pattern.permute.xlu0 0
  %287 = vperm.xlu0 %286, %v277
  %v288 = vpop.permute.xlu0 %287
  %291 = vset.pattern.permute.xlu0 0
  %292 = vperm.xlu0 %291, %v278
  %v293 = vpop.permute.xlu0 %292
  %296 = vset.pattern.permute.xlu0 0
  %297 = vperm.xlu0 %296, %v279
  %v298 = vpop.permute.xlu0 %297
  %vm300 = vcmask 523264
  %v302 = vsel %vm300, %v272, 0
  %v305 = vsel %vm300, %v273, 0
  %v308 = vsel %vm300, %v274, 0
  %v311 = vsel %vm300, %v275, 0
  %313 = vmatprep.subr.mxu0 0.0
  %314 = vmatpush1.msra.mxu0 0.0
  %315 = vmatprep.subr.mxu0 0.0
  %316 = vmatpush1.msra.mxu0 0.0
  %317 = vmatprep.subr.mxu0 0.0
  %318 = vmatpush1.msra.mxu0 0.0
  %319 = vmatprep.subr.mxu0 0.0
  %320 = vmatpush1.msra.mxu0 0.0
  %321 = vmatprep.subr.mxu0 0.0
  %322 = vmatpush1.msra.mxu0 0.0
  %323 = vmatprep.subr.mxu0 0.0
  %324 = vmatpush1.msra.mxu0 0.0
  %325 = vmatprep.subr.mxu0 0.0
  %326 = vmatpush1.msra.mxu0 0.0
  %327 = vmatprep.subr.mxu0 0.0
  %328 = vmatpush1.msra.mxu0 0.0
  %329 = vmatprep.subr.mxu0 0.0
  %330 = vmatpush1.msra.mxu0 %v271
  %331 = vmatprep.subr.mxu0 0.0
  %332 = vmatpush1.msra.mxu0 %v270
  %333 = vmatprep.subr.mxu0 0.0
  %334 = vmatpush1.msra.mxu0 %v269
  %335 = vmatprep.subr.mxu0 0.0
  %336 = vmatpush1.msra.mxu0 %v268
  %337 = vmatprep.subr.mxu0 0.0
  %338 = vmatpush1.msra.mxu0 %v267
  %339 = vmatprep.subr.mxu0 0.0
  %340 = vmatpush1.msra.mxu0 %v266
  %341 = vmatprep.subr.mxu0 0.0
  %342 = vmatpush1.msra.mxu0 %v265
  %343 = vmatprep.subr.mxu0 0.0
  %344 = vmatpush1.msra.mxu0 %v264
  %345 = vmatprep.subr.mxu0 0.0
  %346 = vmatpush2.msra.mxu0 0.0
  %347 = vmatprep.subr.mxu0 0.0
  %348 = vmatpush2.msra.mxu0 0.0
  %349 = vmatprep.subr.mxu0 0.0
  %350 = vmatpush2.msra.mxu0 0.0
  %351 = vmatprep.subr.mxu0 0.0
  %352 = vmatpush2.msra.mxu0 0.0
  %353 = vmatprep.subr.mxu0 0.0
  %354 = vmatpush2.msra.mxu0 0.0
  %355 = vmatprep.subr.mxu0 0.0
  %356 = vmatpush2.msra.mxu0 0.0
  %357 = vmatprep.subr.mxu0 0.0
  %358 = vmatpush2.msra.mxu0 0.0
  %359 = vmatprep.subr.mxu0 0.0
  %360 = vmatpush2.msra.mxu0 0.0
  %361 = vmatprep.subr.mxu0 0.0
  %362 = vmatpush2.msra.mxu0 0.0
  %363 = vmatprep.subr.mxu0 0.0
  %364 = vmatpush2.msra.mxu0 0.0
  %365 = vmatprep.subr.mxu0 0.0
  %366 = vmatpush2.msra.mxu0 0.0
  %367 = vmatprep.subr.mxu0 0.0
  %368 = vmatpush2.msra.mxu0 0.0
  %369 = vmatprep.subr.mxu0 0.0
  %370 = vmatpush2.msra.mxu0 0.0
  %371 = vmatprep.subr.mxu0 0.0
  %372 = vmatpush2.msra.mxu0 0.0
  %373 = vmatprep.subr.mxu0 0.0
  %374 = vmatpush2.msra.mxu0 0.0
  %375 = vmatprep.subr.mxu0 0.0
  %376 = vmatpush2.msra.mxu0 0.0
  %377 = vmatprep.mubr.f32.mxu0 0.0
  %378 = vmatmul.mubr.f32.gmra.mxu0 %v302
  %v379 = vpop.f32.mrf.mxu0
  %v380 = vadd.f32 %v283, %v379
  %v381 = vpop.f32.mrf.mxu0
  %382 = vmatprep.mubr.f32.mxu0 0.0
  %383 = vmatmul.mubr.f32.gmra.mxu0 %v305
  %v384 = vpop.f32.mrf.mxu0
  %v385 = vadd.f32 %v288, %v384
  %v386 = vpop.f32.mrf.mxu0
  %387 = vmatprep.mubr.f32.mxu0 0.0
  %388 = vmatmul.mubr.f32.gmra.mxu0 %v308
  %v389 = vpop.f32.mrf.mxu0
  %v390 = vadd.f32 %v293, %v389
  %v391 = vpop.f32.mrf.mxu0
  %392 = vmatprep.mubr.f32.mxu0 0.0
  %393 = vmatmul.mubr.f32.gmra.mxu0 %v311
  %v394 = vpop.f32.mrf.mxu0
  %v395 = vadd.f32 %v298, %v394
  %v396 = vpop.f32.mrf.mxu0
  %397 = vdwg.mxu0
  %v398 = vxor.u32 %v380, 2147483648
  %v399 = vxor.u32 %v385, 2147483648
  %v400 = vxor.u32 %v390, 2147483648
  %v401 = vxor.u32 %v395, 2147483648
  %v402 = vmul.f32 %v398, 1.442695
  %v403 = vpow.pop %v402
  %v404 = vmul.f32 %v399, 1.442695
  %v405 = vpow.pop %v404
  %v406 = vmul.f32 %v400, 1.442695
  %v407 = vpow.pop %v406
  %v408 = vmul.f32 %v401, 1.442695
  %v409 = vpow.pop %v408
  %v410 = vadd.f32 %v403, 1.0
  %v411 = vadd.f32 %v405, 1.0
  %v412 = vadd.f32 %v407, 1.0
  %v413 = vadd.f32 %v409, 1.0
  %v414 = vrcp.pop %v410
  %v415 = vmul.f32 1.0, %v414
  %v416 = vrcp.pop %v411
  %v417 = vmul.f32 1.0, %v416
  %v418 = vrcp.pop %v412
  %v419 = vmul.f32 1.0, %v418
  %v420 = vrcp.pop %v413
  %v421 = vmul.f32 1.0, %v420
  %v422 = vmul.f32 %v380, %v415
  %v423 = vmul.f32 %v385, %v417
  %v424 = vmul.f32 %v390, %v419
  %v425 = vmul.f32 %v395, %v421
  %v426 = vld [vmem:[%s5] sm:$0xff]
  %v427 = vld [vmem:[%s6] sm:$0xff]
  %429 = vset.pattern.permute.xlu0 0
  %430 = vperm.xlu0 %429, %v427
  %v431 = vpop.permute.xlu0 %430
  %vm433 = vcmask 261120
  %v435 = vsel %vm433, %v426, 0
  %437 = vmatprep.subr.mxu0 0.0
  %438 = vmatpush1.msra.mxu0 0.0
  %439 = vmatprep.subr.mxu0 0.0
  %440 = vmatpush1.msra.mxu0 0.0
  %441 = vmatprep.subr.mxu0 0.0
  %442 = vmatpush1.msra.mxu0 0.0
  %443 = vmatprep.subr.mxu0 0.0
  %444 = vmatpush1.msra.mxu0 0.0
  %445 = vmatprep.subr.mxu0 0.0
  %446 = vmatpush1.msra.mxu0 0.0
  %447 = vmatprep.subr.mxu0 0.0
  %448 = vmatpush1.msra.mxu0 0.0
  %449 = vmatprep.subr.mxu0 0.0
  %450 = vmatpush1.msra.mxu0 0.0
  %451 = vmatprep.subr.mxu0 0.0
  %452 = vmatpush1.msra.mxu0 0.0
  %453 = vmatprep.subr.mxu0 0.0
  %454 = vmatpush1.msra.mxu0 0.0
  %455 = vmatprep.subr.mxu0 0.0
  %456 = vmatpush1.msra.mxu0 0.0
  %457 = vmatprep.subr.mxu0 0.0
  %458 = vmatpush1.msra.mxu0 0.0
  %459 = vmatprep.subr.mxu0 0.0
  %460 = vmatpush1.msra.mxu0 0.0
  %461 = vmatprep.subr.mxu0 0.0
  %462 = vmatpush1.msra.mxu0 %v425
  %463 = vmatprep.subr.mxu0 0.0
  %464 = vmatpush1.msra.mxu0 %v424
  %465 = vmatprep.subr.mxu0 0.0
  %466 = vmatpush1.msra.mxu0 %v423
  %467 = vmatprep.subr.mxu0 0.0
  %468 = vmatpush1.msra.mxu0 %v422
  %469 = vmatprep.subr.mxu0 0.0
  %470 = vmatpush2.msra.mxu0 0.0
  %471 = vmatprep.subr.mxu0 0.0
  %472 = vmatpush2.msra.mxu0 0.0
  %473 = vmatprep.subr.mxu0 0.0
  %474 = vmatpush2.msra.mxu0 0.0
  %475 = vmatprep.subr.mxu0 0.0
  %476 = vmatpush2.msra.mxu0 0.0
  %477 = vmatprep.subr.mxu0 0.0
  %478 = vmatpush2.msra.mxu0 0.0
  %479 = vmatprep.subr.mxu0 0.0
  %480 = vmatpush2.msra.mxu0 0.0
  %481 = vmatprep.subr.mxu0 0.0
  %482 = vmatpush2.msra.mxu0 0.0
  %483 = vmatprep.subr.mxu0 0.0
  %484 = vmatpush2.msra.mxu0 0.0
  %485 = vmatprep.subr.mxu0 0.0
  %486 = vmatpush2.msra.mxu0 0.0
  %487 = vmatprep.subr.mxu0 0.0
  %488 = vmatpush2.msra.mxu0 0.0
  %489 = vmatprep.subr.mxu0 0.0
  %490 = vmatpush2.msra.mxu0 0.0
  %491 = vmatprep.subr.mxu0 0.0
  %492 = vmatpush2.msra.mxu0 0.0
  %493 = vmatprep.subr.mxu0 0.0
  %494 = vmatpush2.msra.mxu0 0.0
  %495 = vmatprep.subr.mxu0 0.0
  %496 = vmatpush2.msra.mxu0 0.0
  %497 = vmatprep.subr.mxu0 0.0
  %498 = vmatpush2.msra.mxu0 0.0
  %499 = vmatprep.subr.mxu0 0.0
  %500 = vmatpush2.msra.mxu0 0.0
  %501 = vmatprep.mubr.f32.mxu0 0.0
  %502 = vmatmul.mubr.f32.gmra.mxu0 %v435
  %v503 = vpop.f32.mrf.mxu0
  %v504 = vadd.f32 %v431, %v503
  %v505 = vpop.f32.mrf.mxu0
  %506 = vdwg.mxu0
  %v507 = vxor.u32 %v504, 2147483648
  %v508 = vmul.f32 %v507, 1.442695
  %v509 = vpow.pop %v508
  %v510 = vadd.f32 %v509, 1.0
  %v511 = vrcp.pop %v510
  %v512 = vmul.f32 1.0, %v511
  %vm513 = vcmask 64512
  %514 = vst.msk [vmem:[%s7] sm:$0xff] %vm513, %v512
  // Predicated region
  $region30: #{actor_forward.1} parent=0 // pred_check
    _
  $region31: #{actor_forward.1} parent=0 // pred_check_branch
    %516 = sbr.rel (0) target = $region33
  $region32: #{actor_forward.1} parent=0 // pred_region
    _
  $region33: #{actor_forward.1} parent=0 // pred_fallthru
    _
  // Predicated region
  $region34: #{actor_forward.1} parent=0 // pred_check
    _
  $region35: #{actor_forward.1} parent=0 // pred_check_branch
    %518 = sbr.rel (0) target = $region37
  $region36: #{actor_forward.1} parent=0 // pred_region
    _
  $region37: #{actor_forward.1} parent=0 // pred_fallthru
    _

</llo_original>
